<compile_context>
chip_gen: v5e
topology: v5e:2x2
jax: 0.10.0
libtpu: 0.0.40
codegen_flags: <defaults>
</compile_context>

<pallas_src>
import jax
import jax.numpy as jnp
from jax.experimental import pallas as pl
from jax.experimental.pallas import tpu as pltpu


def rgcn_kernel(a_ref, x_ref, basis_ref, w_comp_ref, loop_w_ref, bias_ref,
                invdeg_ref, o_ref):
    """Grid = (dst tile i [parallel], relation r [arbitrary, reduction])."""
    i = pl.program_id(0)
    r = pl.program_id(1)
    tm = o_ref.shape[0]

    @pl.when(r == 0)
    def _init():
        # Fold self-loop message + bias into step 0 instead of zero-filling an
        # accumulator (o_ref's index_map is constant in r, so the block is resident).
        row0 = pl.multiple_of(i * tm, tm)
        x_dst = x_ref[pl.ds(row0, tm), :]                       # (tm, F_in) bf16
        o_ref[...] = (
            jnp.dot(x_dst, loop_w_ref[...], preferred_element_type=jnp.float32)
            + bias_ref[...]
        )

    # Message passing for relation r: (A_r @ X) * inv_deg   (GraphConv norm='right').
    msg = jnp.dot(a_ref[0], x_ref[...], preferred_element_type=jnp.float32)  # (tm, F_in)
    msg = msg * invdeg_ref[0]                                   # (tm, 1) broadcast

    # Per-relation weight built on-chip from the shared basis: W_r = sum_b c[r,b] * B_b.
    num_bases = basis_ref.shape[0]
    w_r = w_comp_ref[r, 0] * basis_ref[0]                       # f32 via promotion
    for b in range(1, num_bases):
        w_r = w_r + w_comp_ref[r, b] * basis_ref[b]

    o_ref[...] += jnp.dot(msg.astype(jnp.bfloat16),
                          w_r.astype(jnp.bfloat16),
                          preferred_element_type=jnp.float32)

    @pl.when(r == pl.num_programs(1) - 1)
    def _epilogue():
        # activation = ReLU; dropout is identity (eval mode).
        o_ref[...] = jnp.maximum(o_ref[...], 0.0)


def rel_graph_conv_layer(adj, x, basis, w_comp, loop_w, h_bias, *, block_m=128):
    """adj:    (R, N, N) f32 dense adjacency per relation (dst, src); 0/1 entries
       x:      (N, F_in) f32 node features
       basis:  (B, F_in, F_out) weight basis, w_comp: (R, B) basis coefficients
       loop_w: (F_in, F_out) self-loop weight, h_bias: (F_out,)
    """
    R, N_dst, N_src = adj.shape
    assert N_dst == N_src, "homogeneous graph: square adjacency required for self-loop"
    F_in = x.shape[1]
    B, _, F_out = basis.shape

    tm = min(block_m, N_dst)
    assert N_dst % tm == 0, "N must be a multiple of the dst tile size"
    num_tiles = N_dst // tm

    # Precompute inverse in-degree ('right' norm with clamp(min=1)) — tiny (R, N, 1) f32.
    deg = jnp.maximum(jnp.sum(adj, axis=2), 1.0)
    inv_deg = (1.0 / deg).reshape(R, N_dst, 1).astype(jnp.float32)

    # bf16 matmul inputs (A is 0/1 -> exact); accumulation stays f32 in the kernel.
    adj_bf = adj.astype(jnp.bfloat16)
    x_bf = x.astype(jnp.bfloat16)
    basis_bf = basis.astype(jnp.bfloat16)
    loop_w_bf = loop_w.astype(jnp.bfloat16)
    bias2d = h_bias.reshape(1, F_out).astype(jnp.float32)
    w_comp = w_comp.astype(jnp.float32)

    return pl.pallas_call(
        rgcn_kernel,
        out_shape=jax.ShapeDtypeStruct((N_dst, F_out), jnp.float32),
        grid_spec=pltpu.PrefetchScalarGridSpec(
            num_scalar_prefetch=0,
            grid=(num_tiles, R),
            in_specs=[
                pl.BlockSpec((1, tm, N_src), lambda i, r: (r, i, 0)),     # A_r dst tile
                pl.BlockSpec((N_src, F_in), lambda i, r: (0, 0)),          # X (resident)
                pl.BlockSpec((B, F_in, F_out), lambda i, r: (0, 0, 0)),    # basis (resident)
                pl.BlockSpec(memory_space=pltpu.MemorySpace.SMEM),         # w_comp (R, B)
                pl.BlockSpec((F_in, F_out), lambda i, r: (0, 0)),          # loop_weight
                pl.BlockSpec((1, F_out), lambda i, r: (0, 0)),             # bias
                pl.BlockSpec((1, tm, 1), lambda i, r: (r, i, 0)),          # inv_deg tile
            ],
            out_specs=pl.BlockSpec((tm, F_out), lambda i, r: (i, 0)),      # accum in-place
        ),
        compiler_params=pltpu.CompilerParams(
            dimension_semantics=("parallel", "arbitrary"),
            vmem_limit_bytes=32 * 1024 * 1024,
        ),
    )(adj_bf, x_bf, basis_bf, w_comp, loop_w_bf, bias2d, inv_deg)


def reference(adj, x, basis, w_comp, loop_w, h_bias):
    """Pure-JAX f32 reference of the same forward pass."""
    w = jnp.einsum("rb,bio->rio", w_comp, basis)                    # expand WeightBasis
    deg = jnp.maximum(jnp.sum(adj, axis=2, keepdims=True), 1.0)     # (R, N, 1)
    msg = jnp.einsum("rnm,mf->rnf", adj, x) / deg                   # (R, N, F_in)
    h = jnp.einsum("rnf,rfo->no", msg, w)                           # sum over relations
    h = h + x @ loop_w
    h = h + h_bias[None, :]
    return jnp.maximum(h, 0.0)


if __name__ == "__main__":
    key = jax.random.PRNGKey(0)
    k_adj, k_x, k_basis, k_comp, k_loop, k_bias = jax.random.split(key, 6)

    # Small but lane-dense synthetic relational graph (single node type, R relations).
    N = 256          # nodes (2 dst tiles of 128)
    F_in = 128       # in_feat  (lane-dense)
    F_out = 128      # out_feat (lane-dense)
    R = 3            # len(rel_names)
    num_bases = 2    # num_bases < R -> basis decomposition path

    # Dense 0/1 adjacency per relation (dst, src), ~30% edge density.
    adj = (jax.random.uniform(k_adj, (R, N, N)) < 0.3).astype(jnp.float32)
    x = jax.random.normal(k_x, (N, F_in), dtype=jnp.float32)

    # WeightBasis parameters: basis (B, F_in, F_out), coefficients (R, B).
    basis = jax.random.normal(k_basis, (num_bases, F_in, F_out), dtype=jnp.float32) * 0.1
    w_comp = jax.random.normal(k_comp, (R, num_bases), dtype=jnp.float32)

    # self-loop weight and bias (module inits bias to zeros; any value is valid at inference).
    loop_w = jax.random.normal(k_loop, (F_in, F_out), dtype=jnp.float32) * 0.1
    h_bias = jax.random.normal(k_bias, (F_out,), dtype=jnp.float32) * 0.1

    out = rel_graph_conv_layer(adj, x, basis, w_comp, loop_w, h_bias, block_m=128)
    out = jax.block_until_ready(out)

    ref = reference(adj, x, basis, w_comp, loop_w, h_bias)
    assert out.shape == (N, F_out)
    # bf16 matmul inputs (with f32 accumulation) vs pure-f32 reference -> relaxed tolerance.
    assert jnp.allclose(out, ref, atol=5e-2, rtol=5e-2), "mismatch vs pure-JAX reference"

    print("KERNEL_OK")
</pallas_src>

<mosaic_0001>
module attributes {stable_mosaic.version = 11 : i64} {
  func.func @rgcn_kernel(%arg0: i32, %arg1: i32, %arg2: memref<1x128x256xbf16, #tpu.memory_space<vmem>>, %arg3: memref<256x128xbf16, #tpu.memory_space<vmem>>, %arg4: memref<2x128x128xbf16, #tpu.memory_space<vmem>>, %arg5: memref<3x2xf32, #tpu.memory_space<smem>>, %arg6: memref<128x128xbf16, #tpu.memory_space<vmem>>, %arg7: memref<1x128xf32, #tpu.memory_space<vmem>>, %arg8: memref<1x128x1xf32, #tpu.memory_space<vmem>>, %arg9: memref<128x128xf32, #tpu.memory_space<vmem>>) attributes {dimension_semantics = [#tpu.dimension_semantics<parallel>, #tpu.dimension_semantics<arbitrary>], iteration_bounds = array<i64: 2, 3>, scalar_prefetch = 0 : i64, scratch_operands = 0 : i64, tpu.core_type = #tpu.core_type<tc>, window_params = [{transform_indices = @transform_0, window_bounds = array<i64: 1, 128, 256>}, {pipeline_mode = #tpu.pipeline_mode<synchronous>, transform_indices = @transform_1, window_bounds = array<i64: 256, 128>}, {pipeline_mode = #tpu.pipeline_mode<synchronous>, transform_indices = @transform_2, window_bounds = array<i64: 2, 128, 128>}, {transform_indices = @transform_3, window_bounds = array<i64: 3, 2>}, {pipeline_mode = #tpu.pipeline_mode<synchronous>, transform_indices = @transform_4, window_bounds = array<i64: 128, 128>}, {pipeline_mode = #tpu.pipeline_mode<synchronous>, transform_indices = @transform_5, window_bounds = array<i64: 1, 128>}, {transform_indices = @transform_6, window_bounds = array<i64: 1, 128, 1>}, {transform_indices = @transform_7, window_bounds = array<i64: 128, 128>}]} {
    %c0_i32 = arith.constant 0 : i32
    %0 = arith.cmpi eq, %arg1, %c0_i32 : i32
    %1 = arith.extui %0 : i1 to i32
    %c0_i32_0 = arith.constant 0 : i32
    %2 = arith.cmpi ne, %1, %c0_i32_0 : i32
    scf.if %2 {
      %c128_i32 = arith.constant 128 : i32
      %35 = arith.muli %arg0, %c128_i32 : i32
      %36 = tpu.assume_multiple %35, 128 : i32
      %37 = arith.index_cast %36 : i32 to index
      %c0_21 = arith.constant 0 : index
      %38 = vector.load %arg3[%37, %c0_21] : memref<256x128xbf16, #tpu.memory_space<vmem>>, vector<128x128xbf16>
      %c0_22 = arith.constant 0 : index
      %c0_23 = arith.constant 0 : index
      %39 = vector.load %arg6[%c0_22, %c0_23] : memref<128x128xbf16, #tpu.memory_space<vmem>>, vector<128x128xbf16>
      %cst_24 = arith.constant dense<0.000000e+00> : vector<128x128xf32>
      %40 = tpu.matmul %38, %39, %cst_24 {dimension_numbers = #tpu.dot_dimension_numbers<[1], [0], [0], [1], [0, 0, 1, 1], [], []>} : vector<128x128xbf16>, vector<128x128xbf16>, vector<128x128xf32> -> vector<128x128xf32>
      %c0_25 = arith.constant 0 : index
      %c0_26 = arith.constant 0 : index
      %41 = vector.load %arg7[%c0_25, %c0_26] : memref<1x128xf32, #tpu.memory_space<vmem>>, vector<1x128xf32>
      %42 = vector.broadcast %41 : vector<1x128xf32> to vector<128x128xf32>
      %43 = arith.addf %40, %42 : vector<128x128xf32>
      %c0_27 = arith.constant 0 : index
      %c0_28 = arith.constant 0 : index
      %44 = vector.load %arg9[%c0_27, %c0_28] : memref<128x128xf32, #tpu.memory_space<vmem>>, vector<128x128xf32>
      tpu.vector_store %arg9[%c0_27, %c0_28], %43 {strides = array<i32>} : memref<128x128xf32, #tpu.memory_space<vmem>>, vector<128x128xf32>,
    } else {
    }
    %c0 = arith.constant 0 : index
    %c0_1 = arith.constant 0 : index
    %c0_2 = arith.constant 0 : index
    %3 = vector.load %arg2[%c0, %c0_1, %c0_2] : memref<1x128x256xbf16, #tpu.memory_space<vmem>>, vector<1x128x256xbf16>
    %4 = vector.shape_cast %3 : vector<1x128x256xbf16> to vector<128x256xbf16>
    %c0_3 = arith.constant 0 : index
    %c0_4 = arith.constant 0 : index
    %5 = vector.load %arg3[%c0_3, %c0_4] : memref<256x128xbf16, #tpu.memory_space<vmem>>, vector<256x128xbf16>
    %cst = arith.constant dense<0.000000e+00> : vector<128x128xf32>
    %6 = tpu.matmul %4, %5, %cst {dimension_numbers = #tpu.dot_dimension_numbers<[1], [0], [0], [1], [0, 0, 1, 1], [], []>} : vector<128x256xbf16>, vector<256x128xbf16>, vector<128x128xf32> -> vector<128x128xf32>
    %c0_5 = arith.constant 0 : index
    %c0_6 = arith.constant 0 : index
    %c0_7 = arith.constant 0 : index
    %7 = vector.load %arg8[%c0_5, %c0_6, %c0_7] : memref<1x128x1xf32, #tpu.memory_space<vmem>>, vector<1x128x1xf32>
    %8 = vector.shape_cast %7 : vector<1x128x1xf32> to vector<128x1xf32>
    %9 = vector.broadcast %8 : vector<128x1xf32> to vector<128x128xf32>
    %10 = arith.mulf %6, %9 : vector<128x128xf32>
    %11 = arith.index_cast %arg1 : i32 to index
    %c0_8 = arith.constant 0 : index
    %12 = memref.load %arg5[%11, %c0_8] : memref<3x2xf32, #tpu.memory_space<smem>>
    %c0_9 = arith.constant 0 : index
    %c0_10 = arith.constant 0 : index
    %c0_11 = arith.constant 0 : index
    %13 = vector.load %arg4[%c0_9, %c0_10, %c0_11] : memref<2x128x128xbf16, #tpu.memory_space<vmem>>, vector<1x128x128xbf16>
    %14 = vector.shape_cast %13 : vector<1x128x128xbf16> to vector<128x128xbf16>
    %15 = arith.extf %14 : vector<128x128xbf16> to vector<128x128xf32>
    %16 = vector.broadcast %12 : f32 to vector<128x128xf32>
    %17 = arith.mulf %16, %15 : vector<128x128xf32>
    %18 = arith.index_cast %arg1 : i32 to index
    %c1 = arith.constant 1 : index
    %19 = memref.load %arg5[%18, %c1] : memref<3x2xf32, #tpu.memory_space<smem>>
    %c1_12 = arith.constant 1 : index
    %c0_13 = arith.constant 0 : index
    %c0_14 = arith.constant 0 : index
    %20 = vector.load %arg4[%c1_12, %c0_13, %c0_14] : memref<2x128x128xbf16, #tpu.memory_space<vmem>>, vector<1x128x128xbf16>
    %21 = vector.shape_cast %20 : vector<1x128x128xbf16> to vector<128x128xbf16>
    %22 = arith.extf %21 : vector<128x128xbf16> to vector<128x128xf32>
    %23 = vector.broadcast %19 : f32 to vector<128x128xf32>
    %24 = arith.mulf %23, %22 : vector<128x128xf32>
    %25 = arith.addf %17, %24 : vector<128x128xf32>
    %c0_15 = arith.constant 0 : index
    %c0_16 = arith.constant 0 : index
    %26 = vector.load %arg9[%c0_15, %c0_16] : memref<128x128xf32, #tpu.memory_space<vmem>>, vector<128x128xf32>
    %27 = arith.truncf %10 : vector<128x128xf32> to vector<128x128xbf16>
    %28 = arith.truncf %25 : vector<128x128xf32> to vector<128x128xbf16>
    %cst_17 = arith.constant dense<0.000000e+00> : vector<128x128xf32>
    %29 = tpu.matmul %27, %28, %cst_17 {dimension_numbers = #tpu.dot_dimension_numbers<[1], [0], [0], [1], [0, 0, 1, 1], [], []>} : vector<128x128xbf16>, vector<128x128xbf16>, vector<128x128xf32> -> vector<128x128xf32>
    %30 = arith.addf %26, %29 : vector<128x128xf32>
    %c0_18 = arith.constant 0 : index
    %c0_19 = arith.constant 0 : index
    %31 = vector.load %arg9[%c0_18, %c0_19] : memref<128x128xf32, #tpu.memory_space<vmem>>, vector<128x128xf32>
    tpu.vector_store %arg9[%c0_18, %c0_19], %30 {strides = array<i32>} : memref<128x128xf32, #tpu.memory_space<vmem>>, vector<128x128xf32>,
    %c2_i32 = arith.constant 2 : i32
    %32 = arith.cmpi eq, %arg1, %c2_i32 : i32
    %33 = arith.extui %32 : i1 to i32
    %c0_i32_20 = arith.constant 0 : i32
    %34 = arith.cmpi ne, %33, %c0_i32_20 : i32
    scf.if %34 {
      %c0_21 = arith.constant 0 : index
      %c0_22 = arith.constant 0 : index
      %35 = vector.load %arg9[%c0_21, %c0_22] : memref<128x128xf32, #tpu.memory_space<vmem>>, vector<128x128xf32>
      %cst_23 = arith.constant 0.000000e+00 : f32
      %36 = vector.broadcast %cst_23 : f32 to vector<128x128xf32>
      %37 = arith.maximumf %35, %36 : vector<128x128xf32>
      %c0_24 = arith.constant 0 : index
      %c0_25 = arith.constant 0 : index
      %38 = vector.load %arg9[%c0_24, %c0_25] : memref<128x128xf32, #tpu.memory_space<vmem>>, vector<128x128xf32>
      tpu.vector_store %arg9[%c0_24, %c0_25], %37 {strides = array<i32>} : memref<128x128xf32, #tpu.memory_space<vmem>>, vector<128x128xf32>,
    } else {
    }
    return
  }
  func.func @transform_0(%arg0: i32, %arg1: i32) -> (i32, i32, i32) {
    %c0_i32 = arith.constant 0 : i32
    %c0_i32_0 = arith.constant 0 : i32
    return %arg1, %arg0, %c0_i32 : i32, i32, i32
  }
  func.func @transform_1(%arg0: i32, %arg1: i32) -> (i32, i32) {
    %c0_i32 = arith.constant 0 : i32
    %c0_i32_0 = arith.constant 0 : i32
    %c0_i32_1 = arith.constant 0 : i32
    return %c0_i32, %c0_i32_0 : i32, i32
  }
  func.func @transform_2(%arg0: i32, %arg1: i32) -> (i32, i32, i32) {
    %c0_i32 = arith.constant 0 : i32
    %c0_i32_0 = arith.constant 0 : i32
    %c0_i32_1 = arith.constant 0 : i32
    %c0_i32_2 = arith.constant 0 : i32
    return %c0_i32, %c0_i32_0, %c0_i32_1 : i32, i32, i32
  }
  func.func @transform_3(%arg0: i32, %arg1: i32) -> (i32, i32) {
    %c0_i32 = arith.constant 0 : i32
    %c0_i32_0 = arith.constant 0 : i32
    %c0_i32_1 = arith.constant 0 : i32
    return %c0_i32, %c0_i32_0 : i32, i32
  }
  func.func @transform_4(%arg0: i32, %arg1: i32) -> (i32, i32) {
    %c0_i32 = arith.constant 0 : i32
    %c0_i32_0 = arith.constant 0 : i32
    %c0_i32_1 = arith.constant 0 : i32
    return %c0_i32, %c0_i32_0 : i32, i32
  }
  func.func @transform_5(%arg0: i32, %arg1: i32) -> (i32, i32) {
    %c0_i32 = arith.constant 0 : i32
    %c0_i32_0 = arith.constant 0 : i32
    %c0_i32_1 = arith.constant 0 : i32
    return %c0_i32, %c0_i32_0 : i32, i32
  }
  func.func @transform_6(%arg0: i32, %arg1: i32) -> (i32, i32, i32) {
    %c0_i32 = arith.constant 0 : i32
    %c0_i32_0 = arith.constant 0 : i32
    return %arg1, %arg0, %c0_i32 : i32, i32, i32
  }
  func.func @transform_7(%arg0: i32, %arg1: i32) -> (i32, i32) {
    %c0_i32 = arith.constant 0 : i32
    %c0_i32_0 = arith.constant 0 : i32
    return %arg0, %c0_i32 : i32, i32
  }
}

</mosaic_0001>

<llo_original>
// kernel: tpu_custom_call.1
$region0: #{tpu_custom_call.1}
  #allocation0 [shape = 'u32[]', space=smem, size = 0x4, offset = 0x4, fixed_abs, tag = 'smem constant byte address 0x4 - core index']
  #allocation1 [shape = 'u32[72,128]{1,0:T(1,128)}', space=vmem, size = 0x9000, scoped, tag = 'internal scratch']
  %s0 = inlined_call_operand.vmem [shape: bf16[3,256,256], index: 0, kind: input, shape index: {}]
  %s1 = inlined_call_operand.hbm [shape: bf16[256,128], index: 1, kind: input, shape index: {}]
  %s2 = inlined_call_operand.hbm [shape: bf16[2,128,128], index: 2, kind: input, shape index: {}]
  %s3 = inlined_call_operand.vmem [shape: f32[3,2], index: 3, kind: input, shape index: {}]
  %s4 = inlined_call_operand.hbm [shape: bf16[128,128], index: 4, kind: input, shape index: {}]
  %s5 = inlined_call_operand.vmem [shape: f32[1,128], index: 5, kind: input, shape index: {}]
  %s6 = inlined_call_operand.vmem [shape: f32[3,256,1], index: 6, kind: input, shape index: {}]
  %s7 = inlined_call_operand.hbm [shape: f32[256,128], index: 7, kind: output, shape index: {}]
  %s8 = sld [smem:[#allocation0]]
  $region85: #{tpu_custom_call.1} parent=0
    _
  %s10 = ssub.s32 1, %s8
  %s11 = scalar_select 0, %s10, %s8
  $region1: #{tpu_custom_call.1} parent=0
    #allocation2 [shape = 'u8[65536]{0}', space=vmem, size = 0x10000, scoped, tag = 'input window, operand 1, single buffered']
    #allocation3 [shape = 's32[2]{0}', space=sflag, size = 0x8, scoped, tag = 'scoped memory for tpu_custom_call.1']
    #allocation4 [shape = 's32[2]{0}', space=sflag, size = 0x8, scoped, tag = 'scoped memory for tpu_custom_call.1']
    #allocation5 [shape = 's32[2]{0}', space=sflag, size = 0x8, scoped, tag = 'scoped memory for tpu_custom_call.1']
    #allocation6 [shape = 'u8[65536]{0}', space=vmem, size = 0x10000, scoped, tag = 'input window, operand 2, single buffered']
    #allocation7 [shape = 's32[1]{0}', space=sflag, size = 0x4, scoped, tag = 'scoped memory for tpu_custom_call.1']
    #allocation8 [shape = 'u8[2048]{0}', space=smem, size = 0x800, scoped, tag = 'input window, operand 3, single buffered']
    #allocation9 [shape = 'u8[32768]{0}', space=vmem, size = 0x8000, scoped, tag = 'input window, operand 4, single buffered']
    #allocation10 [shape = 'u8[131072]{0}', space=vmem, size = 0x20000, scoped, tag = 'output window, operand 0']
    %12 = vsyncpa [#allocation3], 0
    %13 = vsyncpa [#allocation7], 0
    %14 = vsyncpa [#allocation5], 0
    %15 = vsyncpa [#allocation4], 0
    %s16 = scalar_lea.sflag [#allocation4], 1
    %17 = vsyncpa %s16, 0
    loop: start=0, step=1, limit=8
    $region2: #{tpu_custom_call.1} parent=1 // loop_pre_header
      _
    $region3: #{tpu_custom_call.1} parent=1 // loop_header
      %s19 = sphi 0, %s23
      %p20 = scmp.ge.s32.totalorder %s19, 8
      %s26 = sphi 0, %s38
      %s27 = sphi 0, %s34
      %s28 = sphi 0, %s26
      %s29 = sphi 0, %s27
      %s30 = sphi 0, %s28
      %s31 = sphi 0, %s29
      %s43 = sphi 0, %s45
      %s46 = sphi 0, %s43
      %s47 = sphi 0, %s46
      %s63 = sphi 0, %s47
      %s67 = sphi 0, %s67
      %s69 = sphi 0, %s67
      %s70 = sphi 0, %s69
      %s84 = sphi 0, %s70
      %s88 = sphi 0, %s88
      %s90 = sphi 0, %s88
      %s91 = sphi 0, %s90
      %s105 = sphi 0, %s91
      %s109 = sphi 0, %s109
      %s111 = sphi 0, %s109
      %s112 = sphi 0, %s111
      %s126 = sphi 0, %s112
      %s130 = sphi 0, %s130
      %s132 = sphi 0, %s130
      %s133 = sphi 0, %s132
      %s147 = sphi 0, %s133
      %s151 = sphi 0, %s151
      %s153 = sphi 0, %s151
      %s154 = sphi 0, %s153
      %s168 = sphi 0, %s154
      %s176 = sphi 0, %s178
      %s179 = sphi 0, %s176
      %s180 = sphi 0, %s179
      %s196 = sphi 0, %s180
      %s202 = sphi 0, %s204
      %s205 = sphi 0, %s202
      %s206 = sphi 0, %s205
      %s222 = sphi 0, %s206
    $region4: #{tpu_custom_call.1} parent=1 // loop_header_branch
      %22 = sbr.rel (%p20) target = $region8
    $region5: #{tpu_custom_call.1} parent=1 // loop_body
      %s24 = ssub.s32 %s19, 1
      %s25 = ssub.s32 %s19, 2
      %s32 = sadd.s32 1, %s27
      %p33 = scmp.ge.s32.totalorder %s32, 3
      %s34 = scalar_select %p33, 0, %s32
      %s35 = sadd.s32 1, %s26
      %s36 = scalar_select %p33, %s35, %s26
      %p37 = scmp.ge.s32.totalorder %s36, 2
      %s38 = scalar_select %p37, 0, %s36
      %s39 = ssub.s32 %s27, %s34
      %s40 = ssub.s32 %s26, %s38
      %s41 = sor.u32 %s39, %s40
      %p42 = scmp.eq.s32.totalorder %s41, 0
      %s44 = sadd.s32 %s43, 1
      %s45 = scalar_select %p42, %s43, %s44
      %p48 = pneg %p42
      %p49 = scmp.eq.s32.totalorder %s19, 5
      %p50 = por %p48, %p49
      %p51 = scmp.ne.s32.totalorder %s43, %s46
      %p52 = scmp.eq.s32.totalorder %s19, 0
      %p53 = por %p51, %p52
      %p54 = scmp.ne.s32.totalorder %s43, %s46
      %p55 = scmp.eq.s32.totalorder %s24, 5
      %p56 = por %p54, %p55
      %p57 = scmp.ne.s32.totalorder %s46, %s47
      %p58 = scmp.eq.s32.totalorder %s24, 0
      %p59 = por %p57, %p58
      %p60 = scmp.ne.s32.totalorder %s46, %s47
      %p61 = scmp.eq.s32.totalorder %s25, 5
      %p62 = por %p60, %p61
      %p64 = scmp.ne.s32.totalorder %s47, %s63
      %p65 = scmp.eq.s32.totalorder %s25, 0
      %p66 = por %p64, %p65
      %s68 = sadd.s32 %s67, 1
      %p71 = scmp.eq.s32.totalorder %s19, 5
      %p72 = scmp.ne.s32.totalorder %s67, %s69
      %p73 = scmp.eq.s32.totalorder %s19, 0
      %p74 = por %p72, %p73
      %p75 = scmp.ne.s32.totalorder %s67, %s69
      %p76 = scmp.eq.s32.totalorder %s24, 5
      %p77 = por %p75, %p76
      %p78 = scmp.ne.s32.totalorder %s69, %s70
      %p79 = scmp.eq.s32.totalorder %s24, 0
      %p80 = por %p78, %p79
      %p81 = scmp.ne.s32.totalorder %s69, %s70
      %p82 = scmp.eq.s32.totalorder %s25, 5
      %p83 = por %p81, %p82
      %p85 = scmp.ne.s32.totalorder %s70, %s84
      %p86 = scmp.eq.s32.totalorder %s25, 0
      %p87 = por %p85, %p86
      %s89 = sadd.s32 %s88, 1
      %p92 = scmp.eq.s32.totalorder %s19, 5
      %p93 = scmp.ne.s32.totalorder %s88, %s90
      %p94 = scmp.eq.s32.totalorder %s19, 0
      %p95 = por %p93, %p94
      %p96 = scmp.ne.s32.totalorder %s88, %s90
      %p97 = scmp.eq.s32.totalorder %s24, 5
      %p98 = por %p96, %p97
      %p99 = scmp.ne.s32.totalorder %s90, %s91
      %p100 = scmp.eq.s32.totalorder %s24, 0
      %p101 = por %p99, %p100
      %p102 = scmp.ne.s32.totalorder %s90, %s91
      %p103 = scmp.eq.s32.totalorder %s25, 5
      %p104 = por %p102, %p103
      %p106 = scmp.ne.s32.totalorder %s91, %s105
      %p107 = scmp.eq.s32.totalorder %s25, 0
      %p108 = por %p106, %p107
      %s110 = sadd.s32 %s109, 1
      %p113 = scmp.eq.s32.totalorder %s19, 5
      %p114 = scmp.ne.s32.totalorder %s109, %s111
      %p115 = scmp.eq.s32.totalorder %s19, 0
      %p116 = por %p114, %p115
      %p117 = scmp.ne.s32.totalorder %s109, %s111
      %p118 = scmp.eq.s32.totalorder %s24, 5
      %p119 = por %p117, %p118
      %p120 = scmp.ne.s32.totalorder %s111, %s112
      %p121 = scmp.eq.s32.totalorder %s24, 0
      %p122 = por %p120, %p121
      %p123 = scmp.ne.s32.totalorder %s111, %s112
      %p124 = scmp.eq.s32.totalorder %s25, 5
      %p125 = por %p123, %p124
      %p127 = scmp.ne.s32.totalorder %s112, %s126
      %p128 = scmp.eq.s32.totalorder %s25, 0
      %p129 = por %p127, %p128
      %s131 = sadd.s32 %s130, 1
      %p134 = scmp.eq.s32.totalorder %s19, 5
      %p135 = scmp.ne.s32.totalorder %s130, %s132
      %p136 = scmp.eq.s32.totalorder %s19, 0
      %p137 = por %p135, %p136
      %p138 = scmp.ne.s32.totalorder %s130, %s132
      %p139 = scmp.eq.s32.totalorder %s24, 5
      %p140 = por %p138, %p139
      %p141 = scmp.ne.s32.totalorder %s132, %s133
      %p142 = scmp.eq.s32.totalorder %s24, 0
      %p143 = por %p141, %p142
      %p144 = scmp.ne.s32.totalorder %s132, %s133
      %p145 = scmp.eq.s32.totalorder %s25, 5
      %p146 = por %p144, %p145
      %p148 = scmp.ne.s32.totalorder %s133, %s147
      %p149 = scmp.eq.s32.totalorder %s25, 0
      %p150 = por %p148, %p149
      %s152 = sadd.s32 %s151, 1
      %p155 = scmp.eq.s32.totalorder %s19, 5
      %p156 = scmp.ne.s32.totalorder %s151, %s153
      %p157 = scmp.eq.s32.totalorder %s19, 0
      %p158 = por %p156, %p157
      %p159 = scmp.ne.s32.totalorder %s151, %s153
      %p160 = scmp.eq.s32.totalorder %s24, 5
      %p161 = por %p159, %p160
      %p162 = scmp.ne.s32.totalorder %s153, %s154
      %p163 = scmp.eq.s32.totalorder %s24, 0
      %p164 = por %p162, %p163
      %p165 = scmp.ne.s32.totalorder %s153, %s154
      %p166 = scmp.eq.s32.totalorder %s25, 5
      %p167 = por %p165, %p166
      %p169 = scmp.ne.s32.totalorder %s154, %s168
      %p170 = scmp.eq.s32.totalorder %s25, 0
      %p171 = por %p169, %p170
      %s172 = ssub.s32 %s27, %s34
      %s173 = ssub.s32 %s26, %s38
      %s174 = sor.u32 %s172, %s173
      %p175 = scmp.eq.s32.totalorder %s174, 0
      %s177 = sadd.s32 %s176, 1
      %s178 = scalar_select %p175, %s176, %s177
      %p181 = pneg %p175
      %p182 = scmp.eq.s32.totalorder %s19, 5
      %p183 = por %p181, %p182
      %p184 = scmp.ne.s32.totalorder %s176, %s179
      %p185 = scmp.eq.s32.totalorder %s19, 0
      %p186 = por %p184, %p185
      %p187 = scmp.ne.s32.totalorder %s176, %s179
      %p188 = scmp.eq.s32.totalorder %s24, 5
      %p189 = por %p187, %p188
      %p190 = scmp.ne.s32.totalorder %s179, %s180
      %p191 = scmp.eq.s32.totalorder %s24, 0
      %p192 = por %p190, %p191
      %p193 = scmp.ne.s32.totalorder %s179, %s180
      %p194 = scmp.eq.s32.totalorder %s25, 5
      %p195 = por %p193, %p194
      %p197 = scmp.ne.s32.totalorder %s180, %s196
      %p198 = scmp.eq.s32.totalorder %s25, 0
      %p199 = por %p197, %p198
      %s200 = ssub.s32 %s26, %s38
      %p201 = scmp.eq.s32.totalorder %s200, 0
      %s203 = sadd.s32 %s202, 1
      %s204 = scalar_select %p201, %s202, %s203
      %p207 = pneg %p201
      %p208 = scmp.eq.s32.totalorder %s19, 5
      %p209 = por %p207, %p208
      %p210 = scmp.ne.s32.totalorder %s202, %s205
      %p211 = scmp.eq.s32.totalorder %s19, 0
      %p212 = por %p210, %p211
      %p213 = scmp.ne.s32.totalorder %s202, %s205
      %p214 = scmp.eq.s32.totalorder %s24, 5
      %p215 = por %p213, %p214
      %p216 = scmp.ne.s32.totalorder %s205, %s206
      %p217 = scmp.eq.s32.totalorder %s24, 0
      %p218 = por %p216, %p217
      %p219 = scmp.ne.s32.totalorder %s205, %s206
      %p220 = scmp.eq.s32.totalorder %s25, 5
      %p221 = por %p219, %p220
      %p223 = scmp.ne.s32.totalorder %s206, %s222
      %p224 = scmp.eq.s32.totalorder %s25, 0
      %p225 = por %p223, %p224
      %p226 = scmp.le.s32.totalorder 1, %s19
      %p227 = scmp.lt.s32.totalorder %s19, 7
      %p228 = pnand %p226, %p227
      %p229 = pneg %p228
      // Predicated region
      $region9: #{tpu_custom_call.1} parent=5 // pred_check
        _
      $region10: #{tpu_custom_call.1} parent=5 // pred_check_branch
        %231 = sbr.rel (%p228) target = $region12
      $region11: #{tpu_custom_call.1} parent=5 // pred_region
        %s232 = ssub.s32 %s19, 1
        // Predicated region
        $region13: #{tpu_custom_call.1} parent=11 // pred_check
          %p233 = pneg %p80
        $region14: #{tpu_custom_call.1} parent=11 // pred_check_branch
          %235 = sbr.rel (%p233) target = $region16
        $region15: #{tpu_custom_call.1} parent=11 // pred_region
          %237 = vsyncadd [#allocation3], 0
          %s238 = sshll.u32 %s1, 4
          %s239 = int_to_ptr.hbm [resolvable:$true] %s238
          %s240 = sshll.u32 [#allocation2], 4
          %s241 = int_to_ptr.vmem [resolvable:$true] %s240
          %246 = dma.hbm_to_vmem [thread:$0]  %s239, 2048, %s241, [#allocation3], 64, 64, 4
        $region16: #{tpu_custom_call.1} parent=11 // pred_fallthru
          _
        // Predicated region
        $region17: #{tpu_custom_call.1} parent=11 // pred_check
          %p247 = pneg %p101
        $region18: #{tpu_custom_call.1} parent=11 // pred_check_branch
          %249 = sbr.rel (%p247) target = $region20
        $region19: #{tpu_custom_call.1} parent=11 // pred_region
          %251 = vsyncadd [#allocation7], 0
          %s252 = sshll.u32 %s2, 4
          %s253 = int_to_ptr.hbm [resolvable:$true] %s252
          %s254 = sshll.u32 [#allocation6], 4
          %s255 = int_to_ptr.vmem [resolvable:$true] %s254
          %260 = dma.hbm_to_vmem [thread:$0]  %s253, 2048, %s255, [#allocation7], 64, 64, 4
        $region20: #{tpu_custom_call.1} parent=11 // pred_fallthru
          _
        // Predicated region
        $region21: #{tpu_custom_call.1} parent=11 // pred_check
          %p261 = pneg %p122
        $region22: #{tpu_custom_call.1} parent=11 // pred_check_branch
          %263 = sbr.rel (%p261) target = $region24
        $region23: #{tpu_custom_call.1} parent=11 // pred_region
          %265 = vsyncadd [#allocation5], 0
          %s267 = sshll.u32 %s3, 4
          %s268 = int_to_ptr.vmem [resolvable:$true] %s267
          %270 = dma.vmem_to_smem %s268, 64, [#allocation8], [#allocation5]
        $region24: #{tpu_custom_call.1} parent=11 // pred_fallthru
          _
        // Predicated region
        $region25: #{tpu_custom_call.1} parent=11 // pred_check
          %p271 = pneg %p143
        $region26: #{tpu_custom_call.1} parent=11 // pred_check_branch
          %273 = sbr.rel (%p271) target = $region28
        $region27: #{tpu_custom_call.1} parent=11 // pred_region
          %275 = vsyncadd [#allocation7], 0
          %s276 = sshll.u32 %s4, 4
          %s277 = int_to_ptr.hbm [resolvable:$true] %s276
          %s278 = sshll.u32 [#allocation9], 4
          %s279 = int_to_ptr.vmem [resolvable:$true] %s278
          %284 = dma.hbm_to_vmem [thread:$0]  %s277, 1024, %s279, [#allocation7], 64, 64, 4
        $region28: #{tpu_custom_call.1} parent=11 // pred_fallthru
          _
        // Predicated region
        $region29: #{tpu_custom_call.1} parent=11 // pred_check
          %p285 = pneg %p164
        $region30: #{tpu_custom_call.1} parent=11 // pred_check_branch
          %287 = sbr.rel (%p285) target = $region32
        $region31: #{tpu_custom_call.1} parent=11 // pred_region
          _
        $region32: #{tpu_custom_call.1} parent=11 // pred_fallthru
          _
      $region12: #{tpu_custom_call.1} parent=5 // pred_fallthru
        _
      %p288 = scmp.lt.s32.totalorder %s19, 6
      // Predicated region
      $region33: #{tpu_custom_call.1} parent=5 // pred_check
        %p289 = pneg %p288
      $region34: #{tpu_custom_call.1} parent=5 // pred_check_branch
        %291 = sbr.rel (%p289) target = $region36
      $region35: #{tpu_custom_call.1} parent=5 // pred_region
        // Predicated region
        $region37: #{tpu_custom_call.1} parent=35 // pred_check
          %p292 = pneg %p53
        $region38: #{tpu_custom_call.1} parent=35 // pred_check_branch
          %294 = sbr.rel (%p292) target = $region40
        $region39: #{tpu_custom_call.1} parent=35 // pred_region
          %s295 = smul.u32 16, %s26
          %p296 = scmp.lt.s32.totalorder %s27, 2
          %s297 = scalar_select %p296, %s27, 2
          %p298 = scmp.lt.s32.totalorder %s295, 31
          %s299 = scalar_select %p298, %s295, 31
          %s300 = smul.addr %s299, 2
          %s301 = smul.addr %s297, 64
          %s302 = sadd.s32 %s300, %s301
          %s303 = smul.addr %s302, 4
          %s304 = scalar_lea.vmem %s0, %s303
          %s305 = smul.u32 16, %s26
        $region40: #{tpu_custom_call.1} parent=35 // pred_fallthru
          _
        // Predicated region
        $region41: #{tpu_custom_call.1} parent=35 // pred_check
          %p306 = pneg %p186
        $region42: #{tpu_custom_call.1} parent=35 // pred_check_branch
          %308 = sbr.rel (%p306) target = $region44
        $region43: #{tpu_custom_call.1} parent=35 // pred_region
          %s309 = smul.u32 16, %s26
          %p310 = scmp.lt.s32.totalorder %s27, 2
          %s311 = scalar_select %p310, %s27, 2
          %p312 = scmp.lt.s32.totalorder %s309, 31
          %s313 = scalar_select %p312, %s309, 31
          %s314 = smul.addr %s311, 32
          %s315 = sadd.s32 %s313, %s314
          %s316 = smul.addr %s315, 8
          %s317 = scalar_lea.vmem %s6, %s316
          %s318 = smul.u32 16, %s26
        $region44: #{tpu_custom_call.1} parent=35 // pred_fallthru
          _
      $region36: #{tpu_custom_call.1} parent=5 // pred_fallthru
        _
      %p319 = scmp.le.s32.totalorder 1, %s19
      %p320 = scmp.lt.s32.totalorder %s19, 7
      %p321 = pnand %p319, %p320
      %p322 = pneg %p321
      // Predicated region
      $region45: #{tpu_custom_call.1} parent=5 // pred_check
        _
      $region46: #{tpu_custom_call.1} parent=5 // pred_check_branch
        %324 = sbr.rel (%p321) target = $region48
      $region47: #{tpu_custom_call.1} parent=5 // pred_region
        %s325 = ssub.s32 %s19, 1
        // Predicated region
        $region49: #{tpu_custom_call.1} parent=47 // pred_check
          %p326 = pneg %p80
        $region50: #{tpu_custom_call.1} parent=47 // pred_check_branch
          %328 = sbr.rel (%p326) target = $region52
        $region51: #{tpu_custom_call.1} parent=47 // pred_region
          %330 = dma.done [#allocation3], 2048
        $region52: #{tpu_custom_call.1} parent=47 // pred_fallthru
          _
        // Predicated region
        $region53: #{tpu_custom_call.1} parent=47 // pred_check
          %p331 = pneg %p101
        $region54: #{tpu_custom_call.1} parent=47 // pred_check_branch
          %333 = sbr.rel (%p331) target = $region56
        $region55: #{tpu_custom_call.1} parent=47 // pred_region
          %335 = dma.done [#allocation7], 2048
        $region56: #{tpu_custom_call.1} parent=47 // pred_fallthru
          _
        // Predicated region
        $region57: #{tpu_custom_call.1} parent=47 // pred_check
          %p336 = pneg %p122
        $region58: #{tpu_custom_call.1} parent=47 // pred_check_branch
          %338 = sbr.rel (%p336) target = $region60
        $region59: #{tpu_custom_call.1} parent=47 // pred_region
          %340 = dma.done [#allocation5], 64
        $region60: #{tpu_custom_call.1} parent=47 // pred_fallthru
          _
        // Predicated region
        $region61: #{tpu_custom_call.1} parent=47 // pred_check
          %p341 = pneg %p143
        $region62: #{tpu_custom_call.1} parent=47 // pred_check_branch
          %343 = sbr.rel (%p341) target = $region64
        $region63: #{tpu_custom_call.1} parent=47 // pred_region
          %345 = dma.done [#allocation7], 1024
        $region64: #{tpu_custom_call.1} parent=47 // pred_fallthru
          _
        %346 = sfence
        %s347 = smul.u32 16, %s28
        %p348 = scmp.lt.s32.totalorder %s29, 2
        %s349 = scalar_select %p348, %s29, 2
        %p350 = scmp.lt.s32.totalorder %s347, 31
        %s351 = scalar_select %p350, %s347, 31
        %s352 = smul.addr %s351, 2
        %s353 = smul.addr %s349, 64
        %s354 = sadd.s32 %s352, %s353
        %s355 = smul.addr %s354, 4
        %s356 = scalar_lea.vmem %s0, %s355
        %p357 = pneg %p59
        %p358 = pneg %p56
        %p359 = pneg %p80
        %p360 = pneg %p77
        %p361 = pneg %p101
        %p362 = pneg %p98
        %p363 = pneg %p122
        %p364 = pneg %p119
        %p365 = pneg %p143
        %p366 = pneg %p140
        %p367 = pneg %p164
        %p368 = pneg %p161
        %s369 = smul.u32 16, %s28
        %p370 = scmp.lt.s32.totalorder %s29, 2
        %s371 = scalar_select %p370, %s29, 2
        %p372 = scmp.lt.s32.totalorder %s369, 31
        %s373 = scalar_select %p372, %s369, 31
        %s374 = smul.addr %s371, 32
        %s375 = sadd.s32 %s373, %s374
        %s376 = smul.addr %s375, 8
        %s377 = scalar_lea.vmem %s6, %s376
        %p378 = pneg %p192
        %p379 = pneg %p189
        %p380 = pneg %p218
        %p381 = pneg %p215
        %s382 = sand.u32 %s205, 1
        %s383 = scalar_lea.sflag [#allocation4], %s382
        %s384 = sand.u32 %s205, 1
        %s385 = smul.addr %s384, 128
        %s386 = scalar_lea.vmem [#allocation10], %s385
        %s387 = smul.u32 16, %s28
        %p388 = scmp.lt.s32.totalorder %s29, 2
        %s389 = scalar_select %p388, %s29, 2
        %p390 = scmp.lt.s32.totalorder %s387, 31
        %s391 = scalar_select %p390, %s387, 31
        %s392 = smul.addr %s391, 2
        %s393 = smul.addr %s389, 64
        %s394 = sadd.s32 %s392, %s393
        %s395 = smul.addr %s394, 4
        %s396 = scalar_lea.vmem %s0, %s395
        %s397 = smul.u32 16, %s28
        %s398 = smul.u32 16, %s28
        %p399 = scmp.lt.s32.totalorder %s29, 2
        %s400 = scalar_select %p399, %s29, 2
        %p401 = scmp.lt.s32.totalorder %s398, 31
        %s402 = scalar_select %p401, %s398, 31
        %s403 = smul.addr %s400, 32
        %s404 = sadd.s32 %s402, %s403
        %s405 = smul.addr %s404, 8
        %s406 = scalar_lea.vmem %s6, %s405
        %s407 = smul.u32 16, %s28
        %s408 = smul.u32 16, %s28
        %p409 = scmp.eq.s32.totalorder %s29, 0
        // Predicated region
        $region65: #{tpu_custom_call.1} parent=47 // pred_check
          %p410 = pneg %p409
        $region66: #{tpu_custom_call.1} parent=47 // pred_check_branch
          %412 = sbr.rel (%p410) target = $region68
        $region67: #{tpu_custom_call.1} parent=47 // pred_region
          %s413 = smul.u32 %s28, 128
          %s414 = sshra.s32 %s413, 3
          %s415 = sand.u32 %s413, 7
          %s416 = smul.addr %s414, 4
          %s417 = scalar_lea.vmem [#allocation2], %s416
          %v418 = vld [vmem:[%s417] sm:$0xf]
          %v419 = vld [vmem:[%s417 + $0x4] sm:$0xf]
          %v420 = vld [vmem:[%s417 + $0x8] sm:$0xf]
          %v421 = vld [vmem:[%s417 + $0xc] sm:$0xf]
          %v422 = vld [vmem:[%s417 + $0x10] sm:$0xf]
          %v423 = vld [vmem:[%s417 + $0x14] sm:$0xf]
          %v424 = vld [vmem:[%s417 + $0x18] sm:$0xf]
          %v425 = vld [vmem:[%s417 + $0x1c] sm:$0xf]
          %v426 = vld [vmem:[%s417 + $0x20] sm:$0xf]
          %v427 = vld [vmem:[%s417 + $0x24] sm:$0xf]
          %v428 = vld [vmem:[%s417 + $0x28] sm:$0xf]
          %v429 = vld [vmem:[%s417 + $0x2c] sm:$0xf]
          %v430 = vld [vmem:[%s417 + $0x30] sm:$0xf]
          %v431 = vld [vmem:[%s417 + $0x34] sm:$0xf]
          %v432 = vld [vmem:[%s417 + $0x38] sm:$0xf]
          %v433 = vld [vmem:[%s417 + $0x3c] sm:$0xf]
          %v434 = vld [vmem:[#allocation9] sm:$0xf]
          %v435 = vld [vmem:[#allocation9 + $0x4] sm:$0xf]
          %v436 = vld [vmem:[#allocation9 + $0x8] sm:$0xf]
          %v437 = vld [vmem:[#allocation9 + $0xc] sm:$0xf]
          %v438 = vld [vmem:[#allocation9 + $0x10] sm:$0xf]
          %v439 = vld [vmem:[#allocation9 + $0x14] sm:$0xf]
          %v440 = vld [vmem:[#allocation9 + $0x18] sm:$0xf]
          %v441 = vld [vmem:[#allocation9 + $0x1c] sm:$0xf]
          %v442 = vld [vmem:[#allocation9 + $0x20] sm:$0xf]
          %v443 = vld [vmem:[#allocation9 + $0x24] sm:$0xf]
          %v444 = vld [vmem:[#allocation9 + $0x28] sm:$0xf]
          %v445 = vld [vmem:[#allocation9 + $0x2c] sm:$0xf]
          %v446 = vld [vmem:[#allocation9 + $0x30] sm:$0xf]
          %v447 = vld [vmem:[#allocation9 + $0x34] sm:$0xf]
          %v448 = vld [vmem:[#allocation9 + $0x38] sm:$0xf]
          %v449 = vld [vmem:[#allocation9 + $0x3c] sm:$0xf]
          %v450 = vld [vmem:[%s5] sm:$0x1]
          %v452 = vperm.slane %v450, 0
          %v470 = vunpack.c.l.b16 %v418
          %v471 = vunpack.c.l.b16 %v419
          %v472 = vunpack.c.l.b16 %v420
          %v473 = vunpack.c.l.b16 %v421
          %v474 = vunpack.c.l.b16 %v422
          %v475 = vunpack.c.l.b16 %v423
          %v476 = vunpack.c.l.b16 %v424
          %v477 = vunpack.c.l.b16 %v425
          %v478 = vunpack.c.l.b16 %v426
          %v479 = vunpack.c.l.b16 %v427
          %v480 = vunpack.c.l.b16 %v428
          %v481 = vunpack.c.l.b16 %v429
          %v482 = vunpack.c.l.b16 %v430
          %v483 = vunpack.c.l.b16 %v431
          %v484 = vunpack.c.l.b16 %v432
          %v485 = vunpack.c.l.b16 %v433
          %v486 = vpack.c.b16 %v471, %v470
          %v487 = vpack.c.b16 %v473, %v472
          %v488 = vpack.c.b16 %v475, %v474
          %v489 = vpack.c.b16 %v477, %v476
          %v490 = vpack.c.b16 %v479, %v478
          %v491 = vpack.c.b16 %v481, %v480
          %v492 = vpack.c.b16 %v483, %v482
          %v493 = vpack.c.b16 %v485, %v484
          %v518 = vunpack.c.l.b16 %v434
          %v519 = vunpack.c.l.b16 %v435
          %v520 = vunpack.c.l.b16 %v436
          %v521 = vunpack.c.l.b16 %v437
          %v522 = vunpack.c.l.b16 %v438
          %v523 = vunpack.c.l.b16 %v439
          %v524 = vunpack.c.l.b16 %v440
          %v525 = vunpack.c.l.b16 %v441
          %v526 = vunpack.c.l.b16 %v442
          %v527 = vunpack.c.l.b16 %v443
          %v528 = vunpack.c.l.b16 %v444
          %v529 = vunpack.c.l.b16 %v445
          %v530 = vunpack.c.l.b16 %v446
          %v531 = vunpack.c.l.b16 %v447
          %v532 = vunpack.c.l.b16 %v448
          %v533 = vunpack.c.l.b16 %v449
          %v534 = vpack.c.b16 %v519, %v518
          %v535 = vpack.c.b16 %v521, %v520
          %v536 = vpack.c.b16 %v523, %v522
          %v537 = vpack.c.b16 %v525, %v524
          %v538 = vpack.c.b16 %v527, %v526
          %v539 = vpack.c.b16 %v529, %v528
          %v540 = vpack.c.b16 %v531, %v530
          %v541 = vpack.c.b16 %v533, %v532
          %550 = vmatpush.bf16.msra.mxu0 %v541
          %551 = vmatpush.bf16.msra.mxu0 %v540
          %552 = vmatpush.bf16.msra.mxu0 %v539
          %553 = vmatpush.bf16.msra.mxu0 %v538
          %554 = vmatpush.bf16.msra.mxu0 %v537
          %555 = vmatpush.bf16.msra.mxu0 %v536
          %556 = vmatpush.bf16.msra.mxu0 %v535
          %557 = vmatpush.bf16.msra.mxu0 %v534
          %558 = vmatmul.bf16.gmra.mxu0 %v486
          %v559 = vpop.f32.mrf.mxu0
          %v560 = vadd.f32 %v452, %v559
          %v561 = vpop.f32.mrf.mxu0
          %v562 = vadd.f32 %v452, %v561
          %563 = vmatmul.bf16.gmra.mxu0 %v487
          %v564 = vpop.f32.mrf.mxu0
          %v565 = vadd.f32 %v452, %v564
          %v566 = vpop.f32.mrf.mxu0
          %v567 = vadd.f32 %v452, %v566
          %568 = vmatmul.bf16.gmra.mxu0 %v488
          %v569 = vpop.f32.mrf.mxu0
          %v570 = vadd.f32 %v452, %v569
          %v571 = vpop.f32.mrf.mxu0
          %v572 = vadd.f32 %v452, %v571
          %573 = vmatmul.bf16.gmra.mxu0 %v489
          %v574 = vpop.f32.mrf.mxu0
          %v575 = vadd.f32 %v452, %v574
          %v576 = vpop.f32.mrf.mxu0
          %v577 = vadd.f32 %v452, %v576
          %578 = vmatmul.bf16.gmra.mxu0 %v490
          %v579 = vpop.f32.mrf.mxu0
          %v580 = vadd.f32 %v452, %v579
          %v581 = vpop.f32.mrf.mxu0
          %v582 = vadd.f32 %v452, %v581
          %583 = vmatmul.bf16.gmra.mxu0 %v491
          %v584 = vpop.f32.mrf.mxu0
          %v585 = vadd.f32 %v452, %v584
          %v586 = vpop.f32.mrf.mxu0
          %v587 = vadd.f32 %v452, %v586
          %588 = vmatmul.bf16.gmra.mxu0 %v492
          %v589 = vpop.f32.mrf.mxu0
          %v590 = vadd.f32 %v452, %v589
          %v591 = vpop.f32.mrf.mxu0
          %v592 = vadd.f32 %v452, %v591
          %593 = vmatmul.bf16.gmra.mxu0 %v493
          %v594 = vpop.f32.mrf.mxu0
          %v595 = vadd.f32 %v452, %v594
          %v596 = vpop.f32.mrf.mxu0
          %v597 = vadd.f32 %v452, %v596
          %598 = vdwg.mxu0
          %599 = vst [vmem:[%s386] sm:$0xff] %v560
          %600 = vst [vmem:[%s386 + $0x8] sm:$0xff] %v562
          %601 = vst [vmem:[%s386 + $0x10] sm:$0xff] %v565
          %602 = vst [vmem:[%s386 + $0x18] sm:$0xff] %v567
          %603 = vst [vmem:[%s386 + $0x20] sm:$0xff] %v570
          %604 = vst [vmem:[%s386 + $0x28] sm:$0xff] %v572
          %605 = vst [vmem:[%s386 + $0x30] sm:$0xff] %v575
          %606 = vst [vmem:[%s386 + $0x38] sm:$0xff] %v577
          %607 = vst [vmem:[%s386 + $0x40] sm:$0xff] %v580
          %608 = vst [vmem:[%s386 + $0x48] sm:$0xff] %v582
          %609 = vst [vmem:[%s386 + $0x50] sm:$0xff] %v585
          %610 = vst [vmem:[%s386 + $0x58] sm:$0xff] %v587
          %611 = vst [vmem:[%s386 + $0x60] sm:$0xff] %v590
          %612 = vst [vmem:[%s386 + $0x68] sm:$0xff] %v592
          %613 = vst [vmem:[%s386 + $0x70] sm:$0xff] %v595
          %614 = vst [vmem:[%s386 + $0x78] sm:$0xff] %v597
        $region68: #{tpu_custom_call.1} parent=47 // pred_fallthru
          _
        %v615 = vld [vmem:[%s396] sm:$0xff]
        %v616 = vld [vmem:[%s396 + $0x8] sm:$0xff]
        %v617 = vld [vmem:[%s396 + $0x10] sm:$0xff]
        %v618 = vld [vmem:[%s396 + $0x18] sm:$0xff]
        %v619 = vld [vmem:[%s396 + $0x20] sm:$0xff]
        %v620 = vld [vmem:[%s396 + $0x28] sm:$0xff]
        %v621 = vld [vmem:[%s396 + $0x30] sm:$0xff]
        %v622 = vld [vmem:[%s396 + $0x38] sm:$0xff]
        %v623 = vld [vmem:[%s396 + $0x40] sm:$0xff]
        %v624 = vld [vmem:[%s396 + $0x48] sm:$0xff]
        %v625 = vld [vmem:[%s396 + $0x50] sm:$0xff]
        %v626 = vld [vmem:[%s396 + $0x58] sm:$0xff]
        %v627 = vld [vmem:[%s396 + $0x60] sm:$0xff]
        %v628 = vld [vmem:[%s396 + $0x68] sm:$0xff]
        %v629 = vld [vmem:[%s396 + $0x70] sm:$0xff]
        %v630 = vld [vmem:[%s396 + $0x78] sm:$0xff]
        %v631 = vld [vmem:[#allocation2] sm:$0xf]
        %v632 = vld [vmem:[#allocation2 + $0x4] sm:$0xf]
        %v633 = vld [vmem:[#allocation2 + $0x8] sm:$0xf]
        %v634 = vld [vmem:[#allocation2 + $0xc] sm:$0xf]
        %v635 = vld [vmem:[#allocation2 + $0x10] sm:$0xf]
        %v636 = vld [vmem:[#allocation2 + $0x14] sm:$0xf]
        %v637 = vld [vmem:[#allocation2 + $0x18] sm:$0xf]
        %v638 = vld [vmem:[#allocation2 + $0x1c] sm:$0xf]
        %v639 = vld [vmem:[#allocation2 + $0x20] sm:$0xf]
        %v640 = vld [vmem:[#allocation2 + $0x24] sm:$0xf]
        %v641 = vld [vmem:[#allocation2 + $0x28] sm:$0xf]
        %v642 = vld [vmem:[#allocation2 + $0x2c] sm:$0xf]
        %v643 = vld [vmem:[#allocation2 + $0x30] sm:$0xf]
        %v644 = vld [vmem:[#allocation2 + $0x34] sm:$0xf]
        %v645 = vld [vmem:[#allocation2 + $0x38] sm:$0xf]
        %v646 = vld [vmem:[#allocation2 + $0x3c] sm:$0xf]
        %v647 = vld [vmem:[#allocation2 + $0x40] sm:$0xf]
        %v648 = vld [vmem:[#allocation2 + $0x44] sm:$0xf]
        %v649 = vld [vmem:[#allocation2 + $0x48] sm:$0xf]
        %v650 = vld [vmem:[#allocation2 + $0x4c] sm:$0xf]
        %v651 = vld [vmem:[#allocation2 + $0x50] sm:$0xf]
        %v652 = vld [vmem:[#allocation2 + $0x54] sm:$0xf]
        %v653 = vld [vmem:[#allocation2 + $0x58] sm:$0xf]
        %v654 = vld [vmem:[#allocation2 + $0x5c] sm:$0xf]
        %v655 = vld [vmem:[#allocation2 + $0x60] sm:$0xf]
        %v656 = vld [vmem:[#allocation2 + $0x64] sm:$0xf]
        %v657 = vld [vmem:[#allocation2 + $0x68] sm:$0xf]
        %v658 = vld [vmem:[#allocation2 + $0x6c] sm:$0xf]
        %v659 = vld [vmem:[#allocation2 + $0x70] sm:$0xf]
        %v660 = vld [vmem:[#allocation2 + $0x74] sm:$0xf]
        %v661 = vld [vmem:[#allocation2 + $0x78] sm:$0xf]
        %v662 = vld [vmem:[#allocation2 + $0x7c] sm:$0xf]
        %v679 = vunpack.c.l.b16 %v615
        %v680 = vunpack.c.h.b16 %v615
        %v681 = vunpack.c.l.b16 %v616
        %v682 = vunpack.c.h.b16 %v616
        %v683 = vunpack.c.l.b16 %v617
        %v684 = vunpack.c.h.b16 %v617
        %v685 = vunpack.c.l.b16 %v618
        %v686 = vunpack.c.h.b16 %v618
        %v687 = vunpack.c.l.b16 %v619
        %v688 = vunpack.c.h.b16 %v619
        %v689 = vunpack.c.l.b16 %v620
        %v690 = vunpack.c.h.b16 %v620
        %v691 = vunpack.c.l.b16 %v621
        %v692 = vunpack.c.h.b16 %v621
        %v693 = vunpack.c.l.b16 %v622
        %v694 = vunpack.c.h.b16 %v622
        %v695 = vunpack.c.l.b16 %v623
        %v696 = vunpack.c.h.b16 %v623
        %v697 = vunpack.c.l.b16 %v624
        %v698 = vunpack.c.h.b16 %v624
        %v699 = vunpack.c.l.b16 %v625
        %v700 = vunpack.c.h.b16 %v625
        %v701 = vunpack.c.l.b16 %v626
        %v702 = vunpack.c.h.b16 %v626
        %v703 = vunpack.c.l.b16 %v627
        %v704 = vunpack.c.h.b16 %v627
        %v705 = vunpack.c.l.b16 %v628
        %v706 = vunpack.c.h.b16 %v628
        %v707 = vunpack.c.l.b16 %v629
        %v708 = vunpack.c.h.b16 %v629
        %v709 = vunpack.c.l.b16 %v630
        %v710 = vunpack.c.h.b16 %v630
        %v711 = vpack.c.b16 %v681, %v679
        %v712 = vpack.c.b16 %v682, %v680
        %v713 = vpack.c.b16 %v685, %v683
        %v714 = vpack.c.b16 %v686, %v684
        %v715 = vpack.c.b16 %v689, %v687
        %v716 = vpack.c.b16 %v690, %v688
        %v717 = vpack.c.b16 %v693, %v691
        %v718 = vpack.c.b16 %v694, %v692
        %v719 = vpack.c.b16 %v697, %v695
        %v720 = vpack.c.b16 %v698, %v696
        %v721 = vpack.c.b16 %v701, %v699
        %v722 = vpack.c.b16 %v702, %v700
        %v723 = vpack.c.b16 %v705, %v703
        %v724 = vpack.c.b16 %v706, %v704
        %v725 = vpack.c.b16 %v709, %v707
        %v726 = vpack.c.b16 %v710, %v708
        %v775 = vunpack.c.l.b16 %v631
        %v776 = vunpack.c.l.b16 %v632
        %v777 = vunpack.c.l.b16 %v633
        %v778 = vunpack.c.l.b16 %v634
        %v779 = vunpack.c.l.b16 %v635
        %v780 = vunpack.c.l.b16 %v636
        %v781 = vunpack.c.l.b16 %v637
        %v782 = vunpack.c.l.b16 %v638
        %v783 = vunpack.c.l.b16 %v639
        %v784 = vunpack.c.l.b16 %v640
        %v785 = vunpack.c.l.b16 %v641
        %v786 = vunpack.c.l.b16 %v642
        %v787 = vunpack.c.l.b16 %v643
        %v788 = vunpack.c.l.b16 %v644
        %v789 = vunpack.c.l.b16 %v645
        %v790 = vunpack.c.l.b16 %v646
        %v791 = vunpack.c.l.b16 %v647
        %v792 = vunpack.c.l.b16 %v648
        %v793 = vunpack.c.l.b16 %v649
        %v794 = vunpack.c.l.b16 %v650
        %v795 = vunpack.c.l.b16 %v651
        %v796 = vunpack.c.l.b16 %v652
        %v797 = vunpack.c.l.b16 %v653
        %v798 = vunpack.c.l.b16 %v654
        %v799 = vunpack.c.l.b16 %v655
        %v800 = vunpack.c.l.b16 %v656
        %v801 = vunpack.c.l.b16 %v657
        %v802 = vunpack.c.l.b16 %v658
        %v803 = vunpack.c.l.b16 %v659
        %v804 = vunpack.c.l.b16 %v660
        %v805 = vunpack.c.l.b16 %v661
        %v806 = vunpack.c.l.b16 %v662
        %v807 = vpack.c.b16 %v776, %v775
        %v808 = vpack.c.b16 %v778, %v777
        %v809 = vpack.c.b16 %v780, %v779
        %v810 = vpack.c.b16 %v782, %v781
        %v811 = vpack.c.b16 %v784, %v783
        %v812 = vpack.c.b16 %v786, %v785
        %v813 = vpack.c.b16 %v788, %v787
        %v814 = vpack.c.b16 %v790, %v789
        %v815 = vpack.c.b16 %v792, %v791
        %v816 = vpack.c.b16 %v794, %v793
        %v817 = vpack.c.b16 %v796, %v795
        %v818 = vpack.c.b16 %v798, %v797
        %v819 = vpack.c.b16 %v800, %v799
        %v820 = vpack.c.b16 %v802, %v801
        %v821 = vpack.c.b16 %v804, %v803
        %v822 = vpack.c.b16 %v806, %v805
        %839 = vmatpush.bf16.msra.mxu0 %v814
        %840 = vmatpush.bf16.msra.mxu0 %v813
        %841 = vmatpush.bf16.msra.mxu0 %v812
        %842 = vmatpush.bf16.msra.mxu0 %v811
        %843 = vmatpush.bf16.msra.mxu0 %v810
        %844 = vmatpush.bf16.msra.mxu0 %v809
        %845 = vmatpush.bf16.msra.mxu0 %v808
        %846 = vmatpush.bf16.msra.mxu0 %v807
        %847 = vmatmul.bf16.gmra.mxu0 %v711
        %v848 = vpop.f32.mrf.mxu0
        %v849 = vadd.f32 0.0, %v848
        %v850 = vpop.f32.mrf.mxu0
        %v851 = vadd.f32 0.0, %v850
        %852 = vmatmul.bf16.gmra.mxu0 %v713
        %v853 = vpop.f32.mrf.mxu0
        %v854 = vadd.f32 0.0, %v853
        %v855 = vpop.f32.mrf.mxu0
        %v856 = vadd.f32 0.0, %v855
        %857 = vmatmul.bf16.gmra.mxu0 %v715
        %v858 = vpop.f32.mrf.mxu0
        %v859 = vadd.f32 0.0, %v858
        %v860 = vpop.f32.mrf.mxu0
        %v861 = vadd.f32 0.0, %v860
        %862 = vmatmul.bf16.gmra.mxu0 %v717
        %v863 = vpop.f32.mrf.mxu0
        %v864 = vadd.f32 0.0, %v863
        %v865 = vpop.f32.mrf.mxu0
        %v866 = vadd.f32 0.0, %v865
        %867 = vmatmul.bf16.gmra.mxu0 %v719
        %v868 = vpop.f32.mrf.mxu0
        %v869 = vadd.f32 0.0, %v868
        %v870 = vpop.f32.mrf.mxu0
        %v871 = vadd.f32 0.0, %v870
        %872 = vmatmul.bf16.gmra.mxu0 %v721
        %v873 = vpop.f32.mrf.mxu0
        %v874 = vadd.f32 0.0, %v873
        %v875 = vpop.f32.mrf.mxu0
        %v876 = vadd.f32 0.0, %v875
        %877 = vmatmul.bf16.gmra.mxu0 %v723
        %v878 = vpop.f32.mrf.mxu0
        %v879 = vadd.f32 0.0, %v878
        %v880 = vpop.f32.mrf.mxu0
        %v881 = vadd.f32 0.0, %v880
        %882 = vmatmul.bf16.gmra.mxu0 %v725
        %v883 = vpop.f32.mrf.mxu0
        %v884 = vadd.f32 0.0, %v883
        %v885 = vpop.f32.mrf.mxu0
        %v886 = vadd.f32 0.0, %v885
        %887 = vdwg.mxu0
        %888 = vmatpush.bf16.msra.mxu0 %v822
        %889 = vmatpush.bf16.msra.mxu0 %v821
        %890 = vmatpush.bf16.msra.mxu0 %v820
        %891 = vmatpush.bf16.msra.mxu0 %v819
        %892 = vmatpush.bf16.msra.mxu0 %v818
        %893 = vmatpush.bf16.msra.mxu0 %v817
        %894 = vmatpush.bf16.msra.mxu0 %v816
        %895 = vmatpush.bf16.msra.mxu0 %v815
        %896 = vmatmul.bf16.gmra.mxu0 %v712
        %v897 = vpop.f32.mrf.mxu0
        %v898 = vadd.f32 %v849, %v897
        %v899 = vpop.f32.mrf.mxu0
        %v900 = vadd.f32 %v851, %v899
        %901 = vmatmul.bf16.gmra.mxu0 %v714
        %v902 = vpop.f32.mrf.mxu0
        %v903 = vadd.f32 %v854, %v902
        %v904 = vpop.f32.mrf.mxu0
        %v905 = vadd.f32 %v856, %v904
        %906 = vmatmul.bf16.gmra.mxu0 %v716
        %v907 = vpop.f32.mrf.mxu0
        %v908 = vadd.f32 %v859, %v907
        %v909 = vpop.f32.mrf.mxu0
        %v910 = vadd.f32 %v861, %v909
        %911 = vmatmul.bf16.gmra.mxu0 %v718
        %v912 = vpop.f32.mrf.mxu0
        %v913 = vadd.f32 %v864, %v912
        %v914 = vpop.f32.mrf.mxu0
        %v915 = vadd.f32 %v866, %v914
        %916 = vmatmul.bf16.gmra.mxu0 %v720
        %v917 = vpop.f32.mrf.mxu0
        %v918 = vadd.f32 %v869, %v917
        %v919 = vpop.f32.mrf.mxu0
        %v920 = vadd.f32 %v871, %v919
        %921 = vmatmul.bf16.gmra.mxu0 %v722
        %v922 = vpop.f32.mrf.mxu0
        %v923 = vadd.f32 %v874, %v922
        %v924 = vpop.f32.mrf.mxu0
        %v925 = vadd.f32 %v876, %v924
        %926 = vmatmul.bf16.gmra.mxu0 %v724
        %v927 = vpop.f32.mrf.mxu0
        %v928 = vadd.f32 %v879, %v927
        %v929 = vpop.f32.mrf.mxu0
        %v930 = vadd.f32 %v881, %v929
        %931 = vmatmul.bf16.gmra.mxu0 %v726
        %v932 = vpop.f32.mrf.mxu0
        %v933 = vadd.f32 %v884, %v932
        %v934 = vpop.f32.mrf.mxu0
        %v935 = vadd.f32 %v886, %v934
        %936 = vdwg.mxu0
        %v937 = vld [vmem:[%s406] sm:$0xff]
        %v938 = vld [vmem:[%s406 + $0x8] sm:$0xff]
        %v939 = vld [vmem:[%s406 + $0x10] sm:$0xff]
        %v940 = vld [vmem:[%s406 + $0x18] sm:$0xff]
        %v941 = vld [vmem:[%s406 + $0x20] sm:$0xff]
        %v942 = vld [vmem:[%s406 + $0x28] sm:$0xff]
        %v943 = vld [vmem:[%s406 + $0x30] sm:$0xff]
        %v944 = vld [vmem:[%s406 + $0x38] sm:$0xff]
        %v945 = vld [vmem:[%s406 + $0x40] sm:$0xff]
        %v946 = vld [vmem:[%s406 + $0x48] sm:$0xff]
        %v947 = vld [vmem:[%s406 + $0x50] sm:$0xff]
        %v948 = vld [vmem:[%s406 + $0x58] sm:$0xff]
        %v949 = vld [vmem:[%s406 + $0x60] sm:$0xff]
        %v950 = vld [vmem:[%s406 + $0x68] sm:$0xff]
        %v951 = vld [vmem:[%s406 + $0x70] sm:$0xff]
        %v952 = vld [vmem:[%s406 + $0x78] sm:$0xff]
        %954 = vset.pattern.permute.xlu0 0
        %955 = vperm.xlu0 %954, %v937
        %v956 = vpop.permute.xlu0 %955
        %959 = vset.pattern.permute.xlu0 0
        %960 = vperm.xlu0 %959, %v938
        %v961 = vpop.permute.xlu0 %960
        %964 = vset.pattern.permute.xlu0 0
        %965 = vperm.xlu0 %964, %v939
        %v966 = vpop.permute.xlu0 %965
        %969 = vset.pattern.permute.xlu0 0
        %970 = vperm.xlu0 %969, %v940
        %v971 = vpop.permute.xlu0 %970
        %974 = vset.pattern.permute.xlu0 0
        %975 = vperm.xlu0 %974, %v941
        %v976 = vpop.permute.xlu0 %975
        %979 = vset.pattern.permute.xlu0 0
        %980 = vperm.xlu0 %979, %v942
        %v981 = vpop.permute.xlu0 %980
        %984 = vset.pattern.permute.xlu0 0
        %985 = vperm.xlu0 %984, %v943
        %v986 = vpop.permute.xlu0 %985
        %989 = vset.pattern.permute.xlu0 0
        %990 = vperm.xlu0 %989, %v944
        %v991 = vpop.permute.xlu0 %990
        %994 = vset.pattern.permute.xlu0 0
        %995 = vperm.xlu0 %994, %v945
        %v996 = vpop.permute.xlu0 %995
        %999 = vset.pattern.permute.xlu0 0
        %1000 = vperm.xlu0 %999, %v946
        %v1001 = vpop.permute.xlu0 %1000
        %1004 = vset.pattern.permute.xlu0 0
        %1005 = vperm.xlu0 %1004, %v947
        %v1006 = vpop.permute.xlu0 %1005
        %1009 = vset.pattern.permute.xlu0 0
        %1010 = vperm.xlu0 %1009, %v948
        %v1011 = vpop.permute.xlu0 %1010
        %1014 = vset.pattern.permute.xlu0 0
        %1015 = vperm.xlu0 %1014, %v949
        %v1016 = vpop.permute.xlu0 %1015
        %1019 = vset.pattern.permute.xlu0 0
        %1020 = vperm.xlu0 %1019, %v950
        %v1021 = vpop.permute.xlu0 %1020
        %1024 = vset.pattern.permute.xlu0 0
        %1025 = vperm.xlu0 %1024, %v951
        %v1026 = vpop.permute.xlu0 %1025
        %1029 = vset.pattern.permute.xlu0 0
        %1030 = vperm.xlu0 %1029, %v952
        %v1031 = vpop.permute.xlu0 %1030
        %v1033 = vmul.f32 %v898, %v956
        %v1034 = vmul.f32 %v900, %v961
        %v1035 = vmul.f32 %v903, %v966
        %v1036 = vmul.f32 %v905, %v971
        %v1037 = vmul.f32 %v908, %v976
        %v1038 = vmul.f32 %v910, %v981
        %v1039 = vmul.f32 %v913, %v986
        %v1040 = vmul.f32 %v915, %v991
        %v1041 = vmul.f32 %v918, %v996
        %v1042 = vmul.f32 %v920, %v1001
        %v1043 = vmul.f32 %v923, %v1006
        %v1044 = vmul.f32 %v925, %v1011
        %v1045 = vmul.f32 %v928, %v1016
        %v1046 = vmul.f32 %v930, %v1021
        %v1047 = vmul.f32 %v933, %v1026
        %v1048 = vmul.f32 %v935, %v1031
        %s1049 = smul.u32 %s29, 128
        %s1050 = sld [smem:[#allocation8 + %s1049]]
        %v1051 = vld [vmem:[#allocation6] sm:$0xf]
        %v1052 = vld [vmem:[#allocation6 + $0x4] sm:$0xf]
        %v1053 = vld [vmem:[#allocation6 + $0x8] sm:$0xf]
        %v1054 = vld [vmem:[#allocation6 + $0xc] sm:$0xf]
        %v1055 = vld [vmem:[#allocation6 + $0x10] sm:$0xf]
        %v1056 = vld [vmem:[#allocation6 + $0x14] sm:$0xf]
        %v1057 = vld [vmem:[#allocation6 + $0x18] sm:$0xf]
        %v1058 = vld [vmem:[#allocation6 + $0x1c] sm:$0xf]
        %v1059 = vld [vmem:[#allocation6 + $0x20] sm:$0xf]
        %v1060 = vld [vmem:[#allocation6 + $0x24] sm:$0xf]
        %v1061 = vld [vmem:[#allocation6 + $0x28] sm:$0xf]
        %v1062 = vld [vmem:[#allocation6 + $0x2c] sm:$0xf]
        %v1063 = vld [vmem:[#allocation6 + $0x30] sm:$0xf]
        %v1064 = vld [vmem:[#allocation6 + $0x34] sm:$0xf]
        %v1065 = vld [vmem:[#allocation6 + $0x38] sm:$0xf]
        %v1066 = vld [vmem:[#allocation6 + $0x3c] sm:$0xf]
        %v1067 = vunpack.c.l.bf16 %v1051
        %v1068 = vunpack.c.l.bf16 %v1052
        %v1069 = vunpack.c.l.bf16 %v1053
        %v1070 = vunpack.c.l.bf16 %v1054
        %v1071 = vunpack.c.l.bf16 %v1055
        %v1072 = vunpack.c.l.bf16 %v1056
        %v1073 = vunpack.c.l.bf16 %v1057
        %v1074 = vunpack.c.l.bf16 %v1058
        %v1075 = vunpack.c.l.bf16 %v1059
        %v1076 = vunpack.c.l.bf16 %v1060
        %v1077 = vunpack.c.l.bf16 %v1061
        %v1078 = vunpack.c.l.bf16 %v1062
        %v1079 = vunpack.c.l.bf16 %v1063
        %v1080 = vunpack.c.l.bf16 %v1064
        %v1081 = vunpack.c.l.bf16 %v1065
        %v1082 = vunpack.c.l.bf16 %v1066
        %v1083 = vstv %s1050
        %v1084 = vmul.f32 %v1083, %v1067
        %v1085 = vmul.f32 %v1083, %v1068
        %v1086 = vmul.f32 %v1083, %v1069
        %v1087 = vmul.f32 %v1083, %v1070
        %v1088 = vmul.f32 %v1083, %v1071
        %v1089 = vmul.f32 %v1083, %v1072
        %v1090 = vmul.f32 %v1083, %v1073
        %v1091 = vmul.f32 %v1083, %v1074
        %v1092 = vmul.f32 %v1083, %v1075
        %v1093 = vmul.f32 %v1083, %v1076
        %v1094 = vmul.f32 %v1083, %v1077
        %v1095 = vmul.f32 %v1083, %v1078
        %v1096 = vmul.f32 %v1083, %v1079
        %v1097 = vmul.f32 %v1083, %v1080
        %v1098 = vmul.f32 %v1083, %v1081
        %v1099 = vmul.f32 %v1083, %v1082
        %s1100 = sadd.s32 %s1049, 1
        %s1101 = sld [smem:[#allocation8 + %s1100]]
        %s1102 = scalar_lea.vmem [#allocation6], 64
        %v1103 = vld [vmem:[%s1102] sm:$0xf]
        %v1104 = vld [vmem:[%s1102 + $0x4] sm:$0xf]
        %v1105 = vld [vmem:[%s1102 + $0x8] sm:$0xf]
        %v1106 = vld [vmem:[%s1102 + $0xc] sm:$0xf]
        %v1107 = vld [vmem:[%s1102 + $0x10] sm:$0xf]
        %v1108 = vld [vmem:[%s1102 + $0x14] sm:$0xf]
        %v1109 = vld [vmem:[%s1102 + $0x18] sm:$0xf]
        %v1110 = vld [vmem:[%s1102 + $0x1c] sm:$0xf]
        %v1111 = vld [vmem:[%s1102 + $0x20] sm:$0xf]
        %v1112 = vld [vmem:[%s1102 + $0x24] sm:$0xf]
        %v1113 = vld [vmem:[%s1102 + $0x28] sm:$0xf]
        %v1114 = vld [vmem:[%s1102 + $0x2c] sm:$0xf]
        %v1115 = vld [vmem:[%s1102 + $0x30] sm:$0xf]
        %v1116 = vld [vmem:[%s1102 + $0x34] sm:$0xf]
        %v1117 = vld [vmem:[%s1102 + $0x38] sm:$0xf]
        %v1118 = vld [vmem:[%s1102 + $0x3c] sm:$0xf]
        %v1119 = vunpack.c.l.bf16 %v1103
        %v1120 = vunpack.c.l.bf16 %v1104
        %v1121 = vunpack.c.l.bf16 %v1105
        %v1122 = vunpack.c.l.bf16 %v1106
        %v1123 = vunpack.c.l.bf16 %v1107
        %v1124 = vunpack.c.l.bf16 %v1108
        %v1125 = vunpack.c.l.bf16 %v1109
        %v1126 = vunpack.c.l.bf16 %v1110
        %v1127 = vunpack.c.l.bf16 %v1111
        %v1128 = vunpack.c.l.bf16 %v1112
        %v1129 = vunpack.c.l.bf16 %v1113
        %v1130 = vunpack.c.l.bf16 %v1114
        %v1131 = vunpack.c.l.bf16 %v1115
        %v1132 = vunpack.c.l.bf16 %v1116
        %v1133 = vunpack.c.l.bf16 %v1117
        %v1134 = vunpack.c.l.bf16 %v1118
        %v1135 = vstv %s1101
        %v1136 = vmul.f32 %v1135, %v1119
        %v1137 = vmul.f32 %v1135, %v1120
        %v1138 = vmul.f32 %v1135, %v1121
        %v1139 = vmul.f32 %v1135, %v1122
        %v1140 = vmul.f32 %v1135, %v1123
        %v1141 = vmul.f32 %v1135, %v1124
        %v1142 = vmul.f32 %v1135, %v1125
        %v1143 = vmul.f32 %v1135, %v1126
        %v1144 = vmul.f32 %v1135, %v1127
        %v1145 = vmul.f32 %v1135, %v1128
        %v1146 = vmul.f32 %v1135, %v1129
        %v1147 = vmul.f32 %v1135, %v1130
        %v1148 = vmul.f32 %v1135, %v1131
        %v1149 = vmul.f32 %v1135, %v1132
        %v1150 = vmul.f32 %v1135, %v1133
        %v1151 = vmul.f32 %v1135, %v1134
        %v1152 = vadd.f32 %v1084, %v1136
        %v1153 = vadd.f32 %v1085, %v1137
        %v1154 = vadd.f32 %v1086, %v1138
        %v1155 = vadd.f32 %v1087, %v1139
        %v1156 = vadd.f32 %v1088, %v1140
        %v1157 = vadd.f32 %v1089, %v1141
        %v1158 = vadd.f32 %v1090, %v1142
        %v1159 = vadd.f32 %v1091, %v1143
        %v1160 = vadd.f32 %v1092, %v1144
        %v1161 = vadd.f32 %v1093, %v1145
        %v1162 = vadd.f32 %v1094, %v1146
        %v1163 = vadd.f32 %v1095, %v1147
        %v1164 = vadd.f32 %v1096, %v1148
        %v1165 = vadd.f32 %v1097, %v1149
        %v1166 = vadd.f32 %v1098, %v1150
        %v1167 = vadd.f32 %v1099, %v1151
        %v1168 = vld [vmem:[%s386] sm:$0xff]
        %v1169 = vld [vmem:[%s386 + $0x8] sm:$0xff]
        %v1170 = vld [vmem:[%s386 + $0x10] sm:$0xff]
        %v1171 = vld [vmem:[%s386 + $0x18] sm:$0xff]
        %v1172 = vld [vmem:[%s386 + $0x20] sm:$0xff]
        %v1173 = vld [vmem:[%s386 + $0x28] sm:$0xff]
        %v1174 = vld [vmem:[%s386 + $0x30] sm:$0xff]
        %v1175 = vld [vmem:[%s386 + $0x38] sm:$0xff]
        %v1176 = vld [vmem:[%s386 + $0x40] sm:$0xff]
        %v1177 = vld [vmem:[%s386 + $0x48] sm:$0xff]
        %v1178 = vld [vmem:[%s386 + $0x50] sm:$0xff]
        %v1179 = vld [vmem:[%s386 + $0x58] sm:$0xff]
        %v1180 = vld [vmem:[%s386 + $0x60] sm:$0xff]
        %v1181 = vld [vmem:[%s386 + $0x68] sm:$0xff]
        %v1182 = vld [vmem:[%s386 + $0x70] sm:$0xff]
        %v1183 = vld [vmem:[%s386 + $0x78] sm:$0xff]
        %v1184 = vpack.c.bf16 %v1034, %v1033
        %v1185 = vpack.c.bf16 %v1036, %v1035
        %v1186 = vpack.c.bf16 %v1038, %v1037
        %v1187 = vpack.c.bf16 %v1040, %v1039
        %v1188 = vpack.c.bf16 %v1042, %v1041
        %v1189 = vpack.c.bf16 %v1044, %v1043
        %v1190 = vpack.c.bf16 %v1046, %v1045
        %v1191 = vpack.c.bf16 %v1048, %v1047
        %v1192 = vpack.c.bf16 %v1153, %v1152
        %v1193 = vpack.c.bf16 %v1155, %v1154
        %v1194 = vpack.c.bf16 %v1157, %v1156
        %v1195 = vpack.c.bf16 %v1159, %v1158
        %v1196 = vpack.c.bf16 %v1161, %v1160
        %v1197 = vpack.c.bf16 %v1163, %v1162
        %v1198 = vpack.c.bf16 %v1165, %v1164
        %v1199 = vpack.c.bf16 %v1167, %v1166
        %1200 = vmatpush.bf16.msra.mxu0 %v1199
        %1201 = vmatpush.bf16.msra.mxu0 %v1198
        %1202 = vmatpush.bf16.msra.mxu0 %v1197
        %1203 = vmatpush.bf16.msra.mxu0 %v1196
        %1204 = vmatpush.bf16.msra.mxu0 %v1195
        %1205 = vmatpush.bf16.msra.mxu0 %v1194
        %1206 = vmatpush.bf16.msra.mxu0 %v1193
        %1207 = vmatpush.bf16.msra.mxu0 %v1192
        %1208 = vmatmul.bf16.gmra.mxu0 %v1184
        %v1209 = vpop.f32.mrf.mxu0
        %v1210 = vadd.f32 0.0, %v1209
        %v1211 = vpop.f32.mrf.mxu0
        %v1212 = vadd.f32 0.0, %v1211
        %1213 = vmatmul.bf16.gmra.mxu0 %v1185
        %v1214 = vpop.f32.mrf.mxu0
        %v1215 = vadd.f32 0.0, %v1214
        %v1216 = vpop.f32.mrf.mxu0
        %v1217 = vadd.f32 0.0, %v1216
        %1218 = vmatmul.bf16.gmra.mxu0 %v1186
        %v1219 = vpop.f32.mrf.mxu0
        %v1220 = vadd.f32 0.0, %v1219
        %v1221 = vpop.f32.mrf.mxu0
        %v1222 = vadd.f32 0.0, %v1221
        %1223 = vmatmul.bf16.gmra.mxu0 %v1187
        %v1224 = vpop.f32.mrf.mxu0
        %v1225 = vadd.f32 0.0, %v1224
        %v1226 = vpop.f32.mrf.mxu0
        %v1227 = vadd.f32 0.0, %v1226
        %1228 = vmatmul.bf16.gmra.mxu0 %v1188
        %v1229 = vpop.f32.mrf.mxu0
        %v1230 = vadd.f32 0.0, %v1229
        %v1231 = vpop.f32.mrf.mxu0
        %v1232 = vadd.f32 0.0, %v1231
        %1233 = vmatmul.bf16.gmra.mxu0 %v1189
        %v1234 = vpop.f32.mrf.mxu0
        %v1235 = vadd.f32 0.0, %v1234
        %v1236 = vpop.f32.mrf.mxu0
        %v1237 = vadd.f32 0.0, %v1236
        %1238 = vmatmul.bf16.gmra.mxu0 %v1190
        %v1239 = vpop.f32.mrf.mxu0
        %v1240 = vadd.f32 0.0, %v1239
        %v1241 = vpop.f32.mrf.mxu0
        %v1242 = vadd.f32 0.0, %v1241
        %1243 = vmatmul.bf16.gmra.mxu0 %v1191
        %v1244 = vpop.f32.mrf.mxu0
        %v1245 = vadd.f32 0.0, %v1244
        %v1246 = vpop.f32.mrf.mxu0
        %v1247 = vadd.f32 0.0, %v1246
        %1248 = vdwg.mxu0
        %v1249 = vadd.f32 %v1168, %v1210
        %v1250 = vadd.f32 %v1169, %v1212
        %v1251 = vadd.f32 %v1170, %v1215
        %v1252 = vadd.f32 %v1171, %v1217
        %v1253 = vadd.f32 %v1172, %v1220
        %v1254 = vadd.f32 %v1173, %v1222
        %v1255 = vadd.f32 %v1174, %v1225
        %v1256 = vadd.f32 %v1175, %v1227
        %v1257 = vadd.f32 %v1176, %v1230
        %v1258 = vadd.f32 %v1177, %v1232
        %v1259 = vadd.f32 %v1178, %v1235
        %v1260 = vadd.f32 %v1179, %v1237
        %v1261 = vadd.f32 %v1180, %v1240
        %v1262 = vadd.f32 %v1181, %v1242
        %v1263 = vadd.f32 %v1182, %v1245
        %v1264 = vadd.f32 %v1183, %v1247
        %1265 = vst [vmem:[%s386] sm:$0xff] %v1249
        %1266 = vst [vmem:[%s386 + $0x8] sm:$0xff] %v1250
        %1267 = vst [vmem:[%s386 + $0x10] sm:$0xff] %v1251
        %1268 = vst [vmem:[%s386 + $0x18] sm:$0xff] %v1252
        %1269 = vst [vmem:[%s386 + $0x20] sm:$0xff] %v1253
        %1270 = vst [vmem:[%s386 + $0x28] sm:$0xff] %v1254
        %1271 = vst [vmem:[%s386 + $0x30] sm:$0xff] %v1255
        %1272 = vst [vmem:[%s386 + $0x38] sm:$0xff] %v1256
        %1273 = vst [vmem:[%s386 + $0x40] sm:$0xff] %v1257
        %1274 = vst [vmem:[%s386 + $0x48] sm:$0xff] %v1258
        %1275 = vst [vmem:[%s386 + $0x50] sm:$0xff] %v1259
        %1276 = vst [vmem:[%s386 + $0x58] sm:$0xff] %v1260
        %1277 = vst [vmem:[%s386 + $0x60] sm:$0xff] %v1261
        %1278 = vst [vmem:[%s386 + $0x68] sm:$0xff] %v1262
        %1279 = vst [vmem:[%s386 + $0x70] sm:$0xff] %v1263
        %1280 = vst [vmem:[%s386 + $0x78] sm:$0xff] %v1264
        %p1281 = scmp.eq.s32.totalorder %s29, 2
        // Predicated region
        $region69: #{tpu_custom_call.1} parent=47 // pred_check
          %p1282 = pneg %p1281
        $region70: #{tpu_custom_call.1} parent=47 // pred_check_branch
          %1284 = sbr.rel (%p1282) target = $region72
        $region71: #{tpu_custom_call.1} parent=47 // pred_region
          %v1285 = vld [vmem:[%s386] sm:$0xff]
          %v1286 = vld [vmem:[%s386 + $0x8] sm:$0xff]
          %v1287 = vld [vmem:[%s386 + $0x10] sm:$0xff]
          %v1288 = vld [vmem:[%s386 + $0x18] sm:$0xff]
          %v1289 = vld [vmem:[%s386 + $0x20] sm:$0xff]
          %v1290 = vld [vmem:[%s386 + $0x28] sm:$0xff]
          %v1291 = vld [vmem:[%s386 + $0x30] sm:$0xff]
          %v1292 = vld [vmem:[%s386 + $0x38] sm:$0xff]
          %v1293 = vld [vmem:[%s386 + $0x40] sm:$0xff]
          %v1294 = vld [vmem:[%s386 + $0x48] sm:$0xff]
          %v1295 = vld [vmem:[%s386 + $0x50] sm:$0xff]
          %v1296 = vld [vmem:[%s386 + $0x58] sm:$0xff]
          %v1297 = vld [vmem:[%s386 + $0x60] sm:$0xff]
          %v1298 = vld [vmem:[%s386 + $0x68] sm:$0xff]
          %v1299 = vld [vmem:[%s386 + $0x70] sm:$0xff]
          %v1300 = vld [vmem:[%s386 + $0x78] sm:$0xff]
          %v1301 = vmax.f32 %v1285, 0.0
          %v1302 = vmax.f32 %v1286, 0.0
          %v1303 = vmax.f32 %v1287, 0.0
          %v1304 = vmax.f32 %v1288, 0.0
          %v1305 = vmax.f32 %v1289, 0.0
          %v1306 = vmax.f32 %v1290, 0.0
          %v1307 = vmax.f32 %v1291, 0.0
          %v1308 = vmax.f32 %v1292, 0.0
          %v1309 = vmax.f32 %v1293, 0.0
          %v1310 = vmax.f32 %v1294, 0.0
          %v1311 = vmax.f32 %v1295, 0.0
          %v1312 = vmax.f32 %v1296, 0.0
          %v1313 = vmax.f32 %v1297, 0.0
          %v1314 = vmax.f32 %v1298, 0.0
          %v1315 = vmax.f32 %v1299, 0.0
          %v1316 = vmax.f32 %v1300, 0.0
          %1317 = vst [vmem:[%s386] sm:$0xff] %v1301
          %1318 = vst [vmem:[%s386 + $0x8] sm:$0xff] %v1302
          %1319 = vst [vmem:[%s386 + $0x10] sm:$0xff] %v1303
          %1320 = vst [vmem:[%s386 + $0x18] sm:$0xff] %v1304
          %1321 = vst [vmem:[%s386 + $0x20] sm:$0xff] %v1305
          %1322 = vst [vmem:[%s386 + $0x28] sm:$0xff] %v1306
          %1323 = vst [vmem:[%s386 + $0x30] sm:$0xff] %v1307
          %1324 = vst [vmem:[%s386 + $0x38] sm:$0xff] %v1308
          %1325 = vst [vmem:[%s386 + $0x40] sm:$0xff] %v1309
          %1326 = vst [vmem:[%s386 + $0x48] sm:$0xff] %v1310
          %1327 = vst [vmem:[%s386 + $0x50] sm:$0xff] %v1311
          %1328 = vst [vmem:[%s386 + $0x58] sm:$0xff] %v1312
          %1329 = vst [vmem:[%s386 + $0x60] sm:$0xff] %v1313
          %1330 = vst [vmem:[%s386 + $0x68] sm:$0xff] %v1314
          %1331 = vst [vmem:[%s386 + $0x70] sm:$0xff] %v1315
          %1332 = vst [vmem:[%s386 + $0x78] sm:$0xff] %v1316
        $region72: #{tpu_custom_call.1} parent=47 // pred_fallthru
          _
        %s1333 = sand.u32 %s205, 1
        %s1334 = scalar_lea.sflag [#allocation4], %s1333
        %s1335 = sand.u32 %s205, 1
        %s1336 = smul.addr %s1335, 128
        %s1337 = scalar_lea.vmem [#allocation10], %s1336
        // Predicated region
        $region73: #{tpu_custom_call.1} parent=47 // pred_check
          %p1338 = pneg %p215
        $region74: #{tpu_custom_call.1} parent=47 // pred_check_branch
          %1340 = sbr.rel (%p1338) target = $region76
        $region75: #{tpu_custom_call.1} parent=47 // pred_region
          %s1341 = smul.u32 16, %s28
          %1343 = vsyncadd %s1334, 0
          %s1344 = smul.addr %s1341, 8
          %s1345 = scalar_lea.hbm %s7, %s1344
          %s1346 = sshll.u32 %s1337, 4
          %s1347 = int_to_ptr.vmem [resolvable:$true] %s1346
          %s1348 = sshll.u32 %s1345, 4
          %s1349 = int_to_ptr.hbm [resolvable:$true] %s1348
          %1354 = dma.vmem_to_hbm [thread:$0]  %s1347, 2048, %s1349, %s1334, 128, 128, 8
        $region76: #{tpu_custom_call.1} parent=47 // pred_fallthru
          _
      $region48: #{tpu_custom_call.1} parent=5 // pred_fallthru
        _
      %p1355 = scmp.le.s32.totalorder 2, %s19
      // Predicated region
      $region77: #{tpu_custom_call.1} parent=5 // pred_check
        %p1356 = pneg %p1355
      $region78: #{tpu_custom_call.1} parent=5 // pred_check_branch
        %1358 = sbr.rel (%p1356) target = $region80
      $region79: #{tpu_custom_call.1} parent=5 // pred_region
        %s1359 = ssub.s32 %s19, 2
        // Predicated region
        $region81: #{tpu_custom_call.1} parent=79 // pred_check
          %p1360 = pneg %p221
        $region82: #{tpu_custom_call.1} parent=79 // pred_check_branch
          %1362 = sbr.rel (%p1360) target = $region84
        $region83: #{tpu_custom_call.1} parent=79 // pred_region
          %s1363 = sand.u32 %s206, 1
          %s1364 = scalar_lea.sflag [#allocation4], %s1363
          %s1365 = sand.u32 %s206, 1
          %s1366 = smul.addr %s1365, 128
          %s1367 = scalar_lea.vmem [#allocation10], %s1366
          %1369 = dma.done %s1364, 2048
        $region84: #{tpu_custom_call.1} parent=79 // pred_fallthru
          _
      $region80: #{tpu_custom_call.1} parent=5 // pred_fallthru
        _
    $region6: #{tpu_custom_call.1} parent=1 // loop_footer
      %s23 = sadd.s32 1, %s19
    $region7: #{tpu_custom_call.1} parent=1 // loop_footer_branch
      %18 = sbr.rel target = $region3
    $region8: #{tpu_custom_call.1} parent=1 // loop_exit
      _
    %1370 = vsyncpa [#allocation3], 1
    %s1371 = scalar_lea.sflag [#allocation3], 1
    %1372 = vsyncpa %s1371, 1
    %1373 = vsyncpa [#allocation7], 1
    %1374 = vsyncpa [#allocation4], 1
    %s1375 = scalar_lea.sflag [#allocation4], 1
    %1376 = vsyncpa %s1375, 1
    %1377 = vsyncpa [#allocation5], 1
    %s1378 = scalar_lea.sflag [#allocation5], 1
    %1379 = vsyncpa %s1378, 1

</llo_original>
